<compile_context>
chip_gen: v7x
topology: tpu7x:2x2x1
jax: 0.10.0
libtpu: 0.0.40
codegen_flags: <defaults>
</compile_context>

<pallas_src>
import functools

import numpy as np
import jax
import jax.numpy as jnp
from jax import lax
from jax.experimental import pallas as pl
from jax.experimental.pallas import tpu as pltpu

KERNEL_SIZE = 7
PAD = 3  # nn.Conv2d(2, 1, kernel_size=7, padding=3, bias=False)


# --------------------------------------------------------------------------- #
# Hardware query & block sizing (generation aware: v5e/v6e vs v7x)
# --------------------------------------------------------------------------- #
def _tpu_vmem_capacity_bytes():
    try:
        return int(pltpu.get_tpu_info().vmem_capacity_bytes)
    except Exception:
        return 128 * 1024 * 1024  # v5e/v6e default if the query is unavailable


def _pick_block_b(B, C, HWp, itemsize, aux_bytes, vmem_cap):
    """Batch-block size `bb` and grid length over the (padded) batch.

    * bb is a multiple of 8 whenever B allows it so the (bb, HWp) conv
      temporaries fill whole sublane tiles.
    * Single-TensorCore chips (v5e/v6e, 128 MiB VMEM): no grid-splitting cap;
      bb grows to the VMEM budget (fewer grid steps, bigger DMAs).
    * Dual-TensorCore chips (v7x, 64 MiB VMEM): target >= 4 grid steps so each
      core pipelines >= 2 blocks, but never shrink a block below ~1 MiB.
    """
    dual_core = vmem_cap <= 96 * 1024 * 1024  # v7x-like (64 MiB per core)

    # Resident VMEM per batch row: double-buffered in+out blocks plus the f32
    # temporaries the kernel materializes (x upcast, product, attention maps).
    per_b = 4 * C * HWp * itemsize + 3 * C * HWp * 4 + 8 * HWp * 4
    budget = max(2 * 1024 * 1024, int(0.45 * vmem_cap) - 2 * aux_bytes)
    bb = max(1, budget // per_b)

    if dual_core:
        min_bb_1mib = max(1, (1024 * 1024) // max(1, C * HWp * itemsize))
        bb = min(bb, max(-(-B // 4), min_bb_1mib))
    bb = min(bb, B)
    if bb >= 8:
        bb = (bb // 8) * 8
    grid = -(-B // bb)
    return bb, grid


def _vmem_limit_bytes(bb, C, HWp, itemsize, aux_bytes, vmem_cap):
    """Scoped-VMEM limit from the real resident footprint: double-buffered
    in/out blocks + aux tables + f32 temporaries + headroom, capped at 75% of
    physical VMEM (<= 48 MiB on 64 MiB v7x, <= 96 MiB on 128 MiB v5e/v6e)."""
    block = bb * C * HWp * itemsize
    resident = 4 * block + 2 * aux_bytes + bb * (3 * C + 8) * HWp * 4
    return int(min(max(2 * resident, 24 * 1024 * 1024), 0.75 * vmem_cap))


# --------------------------------------------------------------------------- #
# Kernel bodies
# --------------------------------------------------------------------------- #
def _sigmoid_eup(z):
    # sigmoid(z) = 0.5 * (tanh(z/2) + 1): one EUP transcendental and two cheap
    # VPU ops; removes the divide from the contended VALU path and is exact
    # (pl.reciprocal(1 + exp(-z), approx=True) is the lossier alternative).
    return 0.5 * (jnp.tanh(0.5 * z) + 1.0)


def _apply_attention(att, x_ref, xf, o_ref):
    # One lane-dense (bb, C, HWp) store. bf16 tensors do the broadcast multiply
    # natively in bf16 (v6e/v7x VALUs) -> half the epilogue vector work.
    if o_ref.dtype == jnp.bfloat16:
        o_ref[...] = att.astype(jnp.bfloat16)[:, None, :] * x_ref[...]
    else:
        o_ref[...] = (att[:, None, :] * xf).astype(o_ref.dtype)


def _spatial_attention_kernel_mxu(band_ref, x_ref, o_ref):
    """7x7 conv of the [avg, max] maps as two MXU matmuls with a band matrix."""
    # band_ref : VMEM f32 (2, HWp, HWp) -- zero padding baked in
    # x_ref    : VMEM (bb, C, HWp); o_ref: same
    xf = x_ref[...].astype(jnp.float32)
    avg = jnp.mean(xf, axis=1)                       # (bb, HWp)
    mx = jnp.max(xf, axis=1)                         # (bb, HWp)
    logits = jnp.dot(avg, band_ref[0], preferred_element_type=jnp.float32)
    logits = logits + jnp.dot(mx, band_ref[1], preferred_element_type=jnp.float32)
    _apply_attention(_sigmoid_eup(logits), x_ref, xf, o_ref)


def _spatial_attention_kernel_roll(w_ref, mask_ref, x_ref, o_ref, *, W):
    """Factored 7x7 conv: 14 column rotates + per-dy VPU sums + 7 row rotates."""
    # w_ref    : SMEM f32[2*K*K]    layout [in_map (0=avg, 1=max), ky, kx]
    # mask_ref : VMEM f32[2*K, HWp] rows 0..K-1 row-valid(dy), K..2K-1 col-valid(dx)
    # x_ref    : VMEM (bb, C, HWp); o_ref: same
    K = KERNEL_SIZE
    bb, _, HWp = x_ref.shape

    xf = x_ref[...].astype(jnp.float32)
    avg = jnp.mean(xf, axis=1)                       # (bb, HWp)
    mx = jnp.max(xf, axis=1)                         # (bb, HWp)

    # Hoist all SMEM weight reads and mask rows out of the loops.
    w = [w_ref[i] for i in range(2 * K * K)]
    row_m = [mask_ref[d:d + 1, :] for d in range(K)]           # (1, HWp)
    col_m = [mask_ref[K + d:K + d + 1, :] for d in range(K)]   # (1, HWp)

    def lane_roll(v, shift):            # shifted[p] = v[(p - shift) % HWp]
        s = shift % HWp
        return v if s == 0 else pltpu.roll(v, s, 1)  # XLU lane rotate (vrot)

    # (1) column-shifted + column-masked copies of each input map: 14 rotates.
    pre_a = [col_m[dx] * lane_roll(avg, -(dx - PAD)) for dx in range(K)]
    pre_m = [col_m[dx] * lane_roll(mx, -(dx - PAD)) for dx in range(K)]

    # (2) per row-offset dy: pure-VPU weighted sum over dx.
    # (3) 7 row rotates (shift = multiple of W) + row masks.  The column mask
    # commutes with the row rotate (p mod W is invariant under shifts by
    # multiples of W), so this equals the per-tap zero-padded conv.
    acc0 = jnp.zeros((bb, HWp), jnp.float32)
    acc1 = jnp.zeros((bb, HWp), jnp.float32)
    for dy in range(K):
        s = w[dy * K] * pre_a[0] + w[K * K + dy * K] * pre_m[0]
        for dx in range(1, K):
            s = s + w[dy * K + dx] * pre_a[dx] + w[K * K + dy * K + dx] * pre_m[dx]
        term = row_m[dy] * lane_roll(s, -(dy - PAD) * W)
        if dy % 2 == 0:
            acc0 = acc0 + term
        else:
            acc1 = acc1 + term
    _apply_attention(_sigmoid_eup(acc0 + acc1), x_ref, xf, o_ref)


# --------------------------------------------------------------------------- #
# Host-side tables
# --------------------------------------------------------------------------- #
def _build_band_matrix(conv_weight, H, W, HWp):
    """(2, HWp, HWp) f32 band matrix: band[m, q, p] is the weight with which
    source pixel q of input map m (0=avg, 1=max) contributes to output pixel p,
    with the conv's zero padding baked in (rows/cols beyond H*W stay zero)."""
    K = KERNEL_SIZE
    HW = H * W
    p = np.arange(HW)
    r, c = p // W, p % W
    tap_idx = np.full((HWp, HWp), K * K, dtype=np.int32)   # K*K == "no tap" -> 0
    for dy in range(K):
        rr = r + dy - PAD
        for dx in range(K):
            cc = c + dx - PAD
            valid = (rr >= 0) & (rr < H) & (cc >= 0) & (cc < W)
            q = rr[valid] * W + cc[valid]
            tap_idx[q, p[valid]] = dy * K + dx
    w = conv_weight.reshape(2, K * K).astype(jnp.float32)
    w_ext = jnp.concatenate([w, jnp.zeros((2, 1), jnp.float32)], axis=1)
    return w_ext[:, tap_idx]                                # jit-friendly gather


def _build_valid_masks(H, W, HWp):
    """(2K, HWp) f32 table: rows 0..K-1 are row-validity for offset dy,
    K..2K-1 are column-validity for offset dx, per flat destination pixel."""
    K = KERNEL_SIZE
    rows = np.arange(HWp) // W
    cols = np.arange(HWp) % W
    tbl = np.zeros((2 * K, HWp), np.float32)
    for d in range(K):
        o = d - PAD
        tbl[d] = ((rows + o >= 0) & (rows + o < H)).astype(np.float32)
        tbl[K + d] = ((cols + o >= 0) & (cols + o < W)).astype(np.float32)
    return jnp.asarray(tbl)


# --------------------------------------------------------------------------- #
# Wrapper
# --------------------------------------------------------------------------- #
def spatial_attention(x, conv_weight, *, conv_impl="auto"):
    """Forward pass of the PyTorch SpatialAttention module.

    x: (B, C, H, W); conv_weight: (1, 2, K, K) from nn.Conv2d(2, 1, 7, padding=3,
    bias=False).  conv_impl: "auto" | "mxu" | "roll".
    """
    B, C, H, W = x.shape
    K = KERNEL_SIZE
    HW = H * W
    HWp = -(-HW // 128) * 128                       # lane-dense flat spatial dim

    vmem_cap = _tpu_vmem_capacity_bytes()
    band_bytes = 2 * HWp * HWp * 4
    can_mxu = (H >= K) and (W >= K)                 # band build assumes no tap aliasing
    if conv_impl == "mxu":
        if not can_mxu:
            raise ValueError("conv_impl='mxu' requires H >= 7 and W >= 7")
        use_mxu = True
    elif conv_impl == "roll":
        use_mxu = False
    else:
        use_mxu = can_mxu and band_bytes <= vmem_cap // 8

    aux_bytes = band_bytes if use_mxu else 2 * K * HWp * 4
    itemsize = x.dtype.itemsize
    bb, grid = _pick_block_b(B, C, HWp, itemsize, aux_bytes, vmem_cap)
    Bp = bb * grid

    x_flat = x.reshape(B, C, HW)
    if HWp != HW:
        x_flat = jnp.pad(x_flat, ((0, 0), (0, 0), (0, HWp - HW)))
    if Bp != B:
        x_flat = jnp.pad(x_flat, ((0, Bp - B), (0, 0), (0, 0)))

    cparams = pltpu.CompilerParams(
        dimension_semantics=("parallel",),
        vmem_limit_bytes=_vmem_limit_bytes(bb, C, HWp, itemsize, aux_bytes, vmem_cap))
    out_shape = jax.ShapeDtypeStruct((Bp, C, HWp), x.dtype)
    x_spec = pl.BlockSpec((bb, C, HWp), lambda b: (b, 0, 0))
    out_spec = pl.BlockSpec((bb, C, HWp), lambda b: (b, 0, 0))

    if use_mxu:
        band = _build_band_matrix(conv_weight, H, W, HWp)
        out_flat = pl.pallas_call(
            _spatial_attention_kernel_mxu,
            out_shape=out_shape,
            grid=(grid,),
            in_specs=[pl.BlockSpec((2, HWp, HWp), lambda b: (0, 0, 0)), x_spec],
            out_specs=out_spec,
            compiler_params=cparams,
        )(band, x_flat)
    else:
        w_flat = conv_weight.reshape(2 * K * K).astype(jnp.float32)
        masks = _build_valid_masks(H, W, HWp)
        out_flat = pl.pallas_call(
            functools.partial(_spatial_attention_kernel_roll, W=W),
            out_shape=out_shape,
            grid=(grid,),
            in_specs=[pl.BlockSpec(memory_space=pltpu.SMEM),          # conv weights
                      pl.BlockSpec((2 * K, HWp), lambda b: (0, 0)),   # validity masks
                      x_spec],
            out_specs=out_spec,
            compiler_params=cparams,
        )(w_flat, masks, x_flat)

    return out_flat[:B, :, :HW].reshape(B, C, H, W)


if __name__ == "__main__":
    key = jax.random.PRNGKey(0)
    kx, kw = jax.random.split(key)

    B, C, H, W = 2, 4, 16, 16
    x = jax.random.normal(kx, (B, C, H, W), dtype=jnp.float32)

    # Same shape / init scale as nn.Conv2d(2, 1, 7, padding=3, bias=False).
    fan_in = 2 * KERNEL_SIZE * KERNEL_SIZE
    bound = 1.0 / (fan_in ** 0.5)
    conv_weight = jax.random.uniform(
        kw, (1, 2, KERNEL_SIZE, KERNEL_SIZE), jnp.float32, -bound, bound)

    # Pure-JAX reference of the PyTorch forward (verification only).
    avg_out = jnp.mean(x, axis=1, keepdims=True)
    max_out = jnp.max(x, axis=1, keepdims=True)
    concat = jnp.concatenate([avg_out, max_out], axis=1)
    att_ref = lax.conv_general_dilated(
        concat, conv_weight, window_strides=(1, 1),
        padding=[(PAD, PAD), (PAD, PAD)],
        dimension_numbers=("NCHW", "OIHW", "NCHW"))
    ref = jax.nn.sigmoid(att_ref) * x

    out_mxu = jax.block_until_ready(
        spatial_attention(x, conv_weight, conv_impl="mxu"))
    out_roll = jax.block_until_ready(
        spatial_attention(x, conv_weight, conv_impl="roll"))

    for out in (out_mxu, out_roll):
        assert out.shape == (B, C, H, W) and out.dtype == x.dtype

    # Roll path is pure f32 VPU math -> tight bound validates the semantics.
    err_roll = float(jnp.max(jnp.abs(out_roll - ref)))
    assert jnp.allclose(out_roll, ref, atol=1e-4, rtol=1e-4), err_roll
    # The MXU path's f32 matmuls may run reduced-precision MXU passes depending
    # on the default matmul precision -> looser (still bug-catching) bound.
    err_mxu = float(jnp.max(jnp.abs(out_mxu - ref)))
    assert jnp.allclose(out_mxu, ref, atol=2e-2, rtol=2e-2), err_mxu

    print("KERNEL_OK")
</pallas_src>

<mosaic_0001>
module attributes {stable_mosaic.version = 11 : i64} {
  func.func @_spatial_attention_kernel_mxu(%arg0: i32, %arg1: memref<2x256x256xf32, #tpu.memory_space<vmem>>, %arg2: memref<2x4x256xf32, #tpu.memory_space<vmem>>, %arg3: memref<2x4x256xf32, #tpu.memory_space<vmem>>) attributes {dimension_semantics = [#tpu.dimension_semantics<parallel>], iteration_bounds = array<i64: 1>, scalar_prefetch = 0 : i64, scratch_operands = 0 : i64, tpu.core_type = #tpu.core_type<tc>, window_params = [{pipeline_mode = #tpu.pipeline_mode<synchronous>, transform_indices = @transform_0, window_bounds = array<i64: 2, 256, 256>}, {transform_indices = @transform_1, window_bounds = array<i64: 2, 4, 256>}, {transform_indices = @transform_2, window_bounds = array<i64: 2, 4, 256>}]} {
    %c0 = arith.constant 0 : index
    %c0_0 = arith.constant 0 : index
    %c0_1 = arith.constant 0 : index
    %0 = vector.load %arg2[%c0, %c0_0, %c0_1] : memref<2x4x256xf32, #tpu.memory_space<vmem>>, vector<2x4x256xf32>
    %cst = arith.constant dense<0.000000e+00> : vector<2x256xf32>
    %1 = vector.multi_reduction <add>, %0, %cst [1] : vector<2x4x256xf32> to vector<2x256xf32>
    %cst_2 = arith.constant 4.000000e+00 : f32
    %2 = vector.broadcast %cst_2 : f32 to vector<2x256xf32>
    %3 = arith.divf %1, %2 : vector<2x256xf32>
    %cst_3 = arith.constant dense<0xFF800000> : vector<2x256xf32>
    %4 = vector.multi_reduction <maximumf>, %0, %cst_3 [1] : vector<2x4x256xf32> to vector<2x256xf32>
    %c0_4 = arith.constant 0 : index
    %c0_5 = arith.constant 0 : index
    %c0_6 = arith.constant 0 : index
    %5 = vector.load %arg1[%c0_4, %c0_5, %c0_6] : memref<2x256x256xf32, #tpu.memory_space<vmem>>, vector<1x256x256xf32>
    %6 = vector.shape_cast %5 : vector<1x256x256xf32> to vector<256x256xf32>
    %cst_7 = arith.constant dense<0.000000e+00> : vector<2x256xf32>
    %7 = tpu.matmul %3, %6, %cst_7 {dimension_numbers = #tpu.dot_dimension_numbers<[1], [0], [0], [1], [0, 0, 1, 1], [], []>} : vector<2x256xf32>, vector<256x256xf32>, vector<2x256xf32> -> vector<2x256xf32>
    %c1 = arith.constant 1 : index
    %c0_8 = arith.constant 0 : index
    %c0_9 = arith.constant 0 : index
    %8 = vector.load %arg1[%c1, %c0_8, %c0_9] : memref<2x256x256xf32, #tpu.memory_space<vmem>>, vector<1x256x256xf32>
    %9 = vector.shape_cast %8 : vector<1x256x256xf32> to vector<256x256xf32>
    %cst_10 = arith.constant dense<0.000000e+00> : vector<2x256xf32>
    %10 = tpu.matmul %4, %9, %cst_10 {dimension_numbers = #tpu.dot_dimension_numbers<[1], [0], [0], [1], [0, 0, 1, 1], [], []>} : vector<2x256xf32>, vector<256x256xf32>, vector<2x256xf32> -> vector<2x256xf32>
    %11 = arith.addf %7, %10 : vector<2x256xf32>
    %cst_11 = arith.constant 5.000000e-01 : f32
    %12 = vector.broadcast %cst_11 : f32 to vector<2x256xf32>
    %13 = arith.mulf %12, %11 : vector<2x256xf32>
    %14 = math.tanh %13 : vector<2x256xf32>
    %cst_12 = arith.constant 1.000000e+00 : f32
    %15 = vector.broadcast %cst_12 : f32 to vector<2x256xf32>
    %16 = arith.addf %14, %15 : vector<2x256xf32>
    %cst_13 = arith.constant 5.000000e-01 : f32
    %17 = vector.broadcast %cst_13 : f32 to vector<2x256xf32>
    %18 = arith.mulf %17, %16 : vector<2x256xf32>
    %19 = vector.shape_cast %18 : vector<2x256xf32> to vector<2x1x256xf32>
    %20 = vector.broadcast %19 : vector<2x1x256xf32> to vector<2x4x256xf32>
    %21 = arith.mulf %20, %0 : vector<2x4x256xf32>
    %c0_14 = arith.constant 0 : index
    %c0_15 = arith.constant 0 : index
    %c0_16 = arith.constant 0 : index
    %22 = vector.load %arg3[%c0_14, %c0_15, %c0_16] : memref<2x4x256xf32, #tpu.memory_space<vmem>>, vector<2x4x256xf32>
    tpu.vector_store %arg3[%c0_14, %c0_15, %c0_16], %21 {strides = array<i32>} : memref<2x4x256xf32, #tpu.memory_space<vmem>>, vector<2x4x256xf32>,
    return
  }
  func.func @transform_0(%arg0: i32) -> (i32, i32, i32) {
    %c0_i32 = arith.constant 0 : i32
    %c0_i32_0 = arith.constant 0 : i32
    %c0_i32_1 = arith.constant 0 : i32
    %c0_i32_2 = arith.constant 0 : i32
    return %c0_i32, %c0_i32_0, %c0_i32_1 : i32, i32, i32
  }
  func.func @transform_1(%arg0: i32) -> (i32, i32, i32) {
    %c0_i32 = arith.constant 0 : i32
    %c0_i32_0 = arith.constant 0 : i32
    %c0_i32_1 = arith.constant 0 : i32
    return %arg0, %c0_i32, %c0_i32_0 : i32, i32, i32
  }
  func.func @transform_2(%arg0: i32) -> (i32, i32, i32) {
    %c0_i32 = arith.constant 0 : i32
    %c0_i32_0 = arith.constant 0 : i32
    %c0_i32_1 = arith.constant 0 : i32
    return %arg0, %c0_i32, %c0_i32_0 : i32, i32, i32
  }
}

</mosaic_0001>

<llo_original>
// kernel: tpu_custom_call.1
$region0: #{tpu_custom_call.1}
  #allocation0 [shape = 'u32[]', space=smem, size = 0x4, offset = 0x4, fixed_abs, tag = 'smem constant byte address 0x4 - core index']
  #allocation1 [shape = 'u32[144,128]{1,0:T(1,128)}', space=vmem, size = 0x12000, scoped, tag = 'internal scratch']
  %s0 = inlined_call_operand.hbm [shape: f32[2,256,256], index: 0, kind: input, shape index: {}]
  %s1 = inlined_call_operand.hbm [shape: f32[2,4,256], index: 1, kind: input, shape index: {}]
  %s2 = inlined_call_operand.hbm [shape: f32[2,4,256], index: 2, kind: output, shape index: {}]
  %s3 = sld [smem:[#allocation0]]
  $region26: #{tpu_custom_call.1} parent=0
    _
  %s5 = ssub.s32 1, %s3
  %s6 = scalar_select 0, %s5, %s3
  $region1: #{tpu_custom_call.1} parent=0
    #allocation2 [shape = 'u8[524288]{0}', space=vmem, size = 0x80000, scoped, tag = 'input window, operand 0, single buffered']
    #allocation3 [shape = 's32[1]{0}', space=sflag, size = 0x4, scoped, tag = 'scoped memory for tpu_custom_call.1']
    #allocation4 [shape = 's32[1]{0}', space=sflag, size = 0x4, scoped, tag = 'scoped memory for tpu_custom_call.1']
    #allocation5 [shape = 'u8[8192]{0}', space=vmem, size = 0x2000, scoped, tag = 'input window, operand 1, single buffered']
    #allocation6 [shape = 's32[1]{0}', space=sflag, size = 0x4, scoped, tag = 'scoped memory for tpu_custom_call.1']
    #allocation7 [shape = 'u8[8192]{0}', space=vmem, size = 0x2000, scoped, tag = 'output window, operand 0, single buffered']
    %7 = vsyncpa [#allocation3], 0
    %8 = vsyncpa [#allocation6], 0
    %9 = vsyncpa [#allocation4], 0
    // Predicated region
    $region2: #{tpu_custom_call.1} parent=1 // pred_check
      _
    $region3: #{tpu_custom_call.1} parent=1 // pred_check_branch
      %11 = sbr.rel (0) target = $region5
    $region4: #{tpu_custom_call.1} parent=1 // pred_region
      %s13 = ssub.s32 16384, 16384
      %14 = vsyncadd [#allocation3], %s13
      %s15 = sshll.u32 [#allocation2], 4
      %s16 = int_to_ptr.vmem [resolvable:$true] %s15
      %21 = dma.hbm_to_vmem [thread:$0]  %s0, 16384, %s16, [#allocation3], 256, 256, 16
    $region5: #{tpu_custom_call.1} parent=1 // pred_fallthru
      _
    // Predicated region
    $region6: #{tpu_custom_call.1} parent=1 // pred_check
      _
    $region7: #{tpu_custom_call.1} parent=1 // pred_check_branch
      %23 = sbr.rel (0) target = $region9
    $region8: #{tpu_custom_call.1} parent=1 // pred_region
      %s25 = ssub.s32 256, 256
      %26 = vsyncadd [#allocation6], %s25
      %s27 = sshll.u32 [#allocation5], 4
      %s28 = int_to_ptr.vmem [resolvable:$true] %s27
      %33 = dma.hbm_to_vmem [thread:$0]  %s1, 256, %s28, [#allocation6], 128, 128, 8
    $region9: #{tpu_custom_call.1} parent=1 // pred_fallthru
      _
    // Predicated region
    $region10: #{tpu_custom_call.1} parent=1 // pred_check
      _
    $region11: #{tpu_custom_call.1} parent=1 // pred_check_branch
      %35 = sbr.rel (0) target = $region13
    $region12: #{tpu_custom_call.1} parent=1 // pred_region
      %36 = dma.done [#allocation3], 16384
    $region13: #{tpu_custom_call.1} parent=1 // pred_fallthru
      _
    // Predicated region
    $region14: #{tpu_custom_call.1} parent=1 // pred_check
      _
    $region15: #{tpu_custom_call.1} parent=1 // pred_check_branch
      %38 = sbr.rel (0) target = $region17
    $region16: #{tpu_custom_call.1} parent=1 // pred_region
      %39 = dma.done [#allocation6], 256
    $region17: #{tpu_custom_call.1} parent=1 // pred_fallthru
      _
    %v40 = vld [vmem:[#allocation5] sm:$0xff]
    %v41 = vld [vmem:[#allocation5 + $0x8] sm:$0xff]
    %v44 = vcombine.high %v40, %v40
    %v45 = vcombine.high %v41, %v41
    %vm48 = vcmask 1043456
    %v49 = vsel %vm48, %v40, 0.0
    %v50 = vrot.slane %v49, 4
    %v51 = vadd.f32 %v49, %v50
    %v52 = vrot.slane %v51, 2
    %v53 = vadd.f32 %v51, %v52
    %v54 = vrot.slane %v53, 1
    %v55 = vadd.f32 %v53, %v54
    %v56 = vsel %vm48, %v44, 0.0
    %v57 = vrot.slane %v56, 4
    %v58 = vadd.f32 %v56, %v57
    %v59 = vrot.slane %v58, 2
    %v60 = vadd.f32 %v58, %v59
    %v61 = vrot.slane %v60, 1
    %v62 = vadd.f32 %v60, %v61
    %v63 = vsel %vm48, %v41, 0.0
    %v64 = vrot.slane %v63, 4
    %v65 = vadd.f32 %v63, %v64
    %v66 = vrot.slane %v65, 2
    %v67 = vadd.f32 %v65, %v66
    %v68 = vrot.slane %v67, 1
    %v69 = vadd.f32 %v67, %v68
    %v70 = vsel %vm48, %v45, 0.0
    %v71 = vrot.slane %v70, 4
    %v72 = vadd.f32 %v70, %v71
    %v73 = vrot.slane %v72, 2
    %v74 = vadd.f32 %v72, %v73
    %v75 = vrot.slane %v74, 1
    %v76 = vadd.f32 %v74, %v75
    %v77 = vrcp.pop 4.0
    %v78 = vmul.f32 %v55, %v77
    %v79 = vmul.f32 %v62, %v77
    %v80 = vmul.f32 %v69, %v77
    %v81 = vmul.f32 %v76, %v77
    %v82 = vsel %vm48, %v40, -inf
    %v83 = vrot.slane %v82, 4
    %v84 = vmax.f32 %v82, %v83
    %v85 = vrot.slane %v84, 2
    %v86 = vmax.f32 %v84, %v85
    %v87 = vrot.slane %v86, 1
    %v88 = vmax.f32 %v86, %v87
    %v89 = vsel %vm48, %v44, -inf
    %v90 = vrot.slane %v89, 4
    %v91 = vmax.f32 %v89, %v90
    %v92 = vrot.slane %v91, 2
    %v93 = vmax.f32 %v91, %v92
    %v94 = vrot.slane %v93, 1
    %v95 = vmax.f32 %v93, %v94
    %v96 = vsel %vm48, %v41, -inf
    %v97 = vrot.slane %v96, 4
    %v98 = vmax.f32 %v96, %v97
    %v99 = vrot.slane %v98, 2
    %v100 = vmax.f32 %v98, %v99
    %v101 = vrot.slane %v100, 1
    %v102 = vmax.f32 %v100, %v101
    %v103 = vsel %vm48, %v45, -inf
    %v104 = vrot.slane %v103, 4
    %v105 = vmax.f32 %v103, %v104
    %v106 = vrot.slane %v105, 2
    %v107 = vmax.f32 %v105, %v106
    %v108 = vrot.slane %v107, 1
    %v109 = vmax.f32 %v107, %v108
    %v110 = vld [vmem:[#allocation2] sm:$0xff]
    %v111 = vld [vmem:[#allocation2 + $0x8] sm:$0xff]
    %v112 = vld [vmem:[#allocation2 + $0x10] sm:$0xff]
    %v113 = vld [vmem:[#allocation2 + $0x18] sm:$0xff]
    %v114 = vld [vmem:[#allocation2 + $0x20] sm:$0xff]
    %v115 = vld [vmem:[#allocation2 + $0x28] sm:$0xff]
    %v116 = vld [vmem:[#allocation2 + $0x30] sm:$0xff]
    %v117 = vld [vmem:[#allocation2 + $0x38] sm:$0xff]
    %v118 = vld [vmem:[#allocation2 + $0x40] sm:$0xff]
    %v119 = vld [vmem:[#allocation2 + $0x48] sm:$0xff]
    %v120 = vld [vmem:[#allocation2 + $0x50] sm:$0xff]
    %v121 = vld [vmem:[#allocation2 + $0x58] sm:$0xff]
    %v122 = vld [vmem:[#allocation2 + $0x60] sm:$0xff]
    %v123 = vld [vmem:[#allocation2 + $0x68] sm:$0xff]
    %v124 = vld [vmem:[#allocation2 + $0x70] sm:$0xff]
    %v125 = vld [vmem:[#allocation2 + $0x78] sm:$0xff]
    %v126 = vld [vmem:[#allocation2 + $0x80] sm:$0xff]
    %v127 = vld [vmem:[#allocation2 + $0x88] sm:$0xff]
    %v128 = vld [vmem:[#allocation2 + $0x90] sm:$0xff]
    %v129 = vld [vmem:[#allocation2 + $0x98] sm:$0xff]
    %v130 = vld [vmem:[#allocation2 + $0xa0] sm:$0xff]
    %v131 = vld [vmem:[#allocation2 + $0xa8] sm:$0xff]
    %v132 = vld [vmem:[#allocation2 + $0xb0] sm:$0xff]
    %v133 = vld [vmem:[#allocation2 + $0xb8] sm:$0xff]
    %v134 = vld [vmem:[#allocation2 + $0xc0] sm:$0xff]
    %v135 = vld [vmem:[#allocation2 + $0xc8] sm:$0xff]
    %v136 = vld [vmem:[#allocation2 + $0xd0] sm:$0xff]
    %v137 = vld [vmem:[#allocation2 + $0xd8] sm:$0xff]
    %v138 = vld [vmem:[#allocation2 + $0xe0] sm:$0xff]
    %v139 = vld [vmem:[#allocation2 + $0xe8] sm:$0xff]
    %v140 = vld [vmem:[#allocation2 + $0xf0] sm:$0xff]
    %v141 = vld [vmem:[#allocation2 + $0xf8] sm:$0xff]
    %v142 = vld [vmem:[#allocation2 + $0x100] sm:$0xff]
    %v143 = vld [vmem:[#allocation2 + $0x108] sm:$0xff]
    %v144 = vld [vmem:[#allocation2 + $0x110] sm:$0xff]
    %v145 = vld [vmem:[#allocation2 + $0x118] sm:$0xff]
    %v146 = vld [vmem:[#allocation2 + $0x120] sm:$0xff]
    %v147 = vld [vmem:[#allocation2 + $0x128] sm:$0xff]
    %v148 = vld [vmem:[#allocation2 + $0x130] sm:$0xff]
    %v149 = vld [vmem:[#allocation2 + $0x138] sm:$0xff]
    %v150 = vld [vmem:[#allocation2 + $0x140] sm:$0xff]
    %v151 = vld [vmem:[#allocation2 + $0x148] sm:$0xff]
    %v152 = vld [vmem:[#allocation2 + $0x150] sm:$0xff]
    %v153 = vld [vmem:[#allocation2 + $0x158] sm:$0xff]
    %v154 = vld [vmem:[#allocation2 + $0x160] sm:$0xff]
    %v155 = vld [vmem:[#allocation2 + $0x168] sm:$0xff]
    %v156 = vld [vmem:[#allocation2 + $0x170] sm:$0xff]
    %v157 = vld [vmem:[#allocation2 + $0x178] sm:$0xff]
    %v158 = vld [vmem:[#allocation2 + $0x180] sm:$0xff]
    %v159 = vld [vmem:[#allocation2 + $0x188] sm:$0xff]
    %v160 = vld [vmem:[#allocation2 + $0x190] sm:$0xff]
    %v161 = vld [vmem:[#allocation2 + $0x198] sm:$0xff]
    %v162 = vld [vmem:[#allocation2 + $0x1a0] sm:$0xff]
    %v163 = vld [vmem:[#allocation2 + $0x1a8] sm:$0xff]
    %v164 = vld [vmem:[#allocation2 + $0x1b0] sm:$0xff]
    %v165 = vld [vmem:[#allocation2 + $0x1b8] sm:$0xff]
    %v166 = vld [vmem:[#allocation2 + $0x1c0] sm:$0xff]
    %v167 = vld [vmem:[#allocation2 + $0x1c8] sm:$0xff]
    %v168 = vld [vmem:[#allocation2 + $0x1d0] sm:$0xff]
    %v169 = vld [vmem:[#allocation2 + $0x1d8] sm:$0xff]
    %v170 = vld [vmem:[#allocation2 + $0x1e0] sm:$0xff]
    %v171 = vld [vmem:[#allocation2 + $0x1e8] sm:$0xff]
    %v172 = vld [vmem:[#allocation2 + $0x1f0] sm:$0xff]
    %v173 = vld [vmem:[#allocation2 + $0x1f8] sm:$0xff]
    %s174 = scalar_lea.vmem [#allocation2], 512
    %v175 = vld [vmem:[%s174] sm:$0xff]
    %v176 = vld [vmem:[%s174 + $0x8] sm:$0xff]
    %v177 = vld [vmem:[%s174 + $0x10] sm:$0xff]
    %v178 = vld [vmem:[%s174 + $0x18] sm:$0xff]
    %v179 = vld [vmem:[%s174 + $0x20] sm:$0xff]
    %v180 = vld [vmem:[%s174 + $0x28] sm:$0xff]
    %v181 = vld [vmem:[%s174 + $0x30] sm:$0xff]
    %v182 = vld [vmem:[%s174 + $0x38] sm:$0xff]
    %v183 = vld [vmem:[%s174 + $0x40] sm:$0xff]
    %v184 = vld [vmem:[%s174 + $0x48] sm:$0xff]
    %v185 = vld [vmem:[%s174 + $0x50] sm:$0xff]
    %v186 = vld [vmem:[%s174 + $0x58] sm:$0xff]
    %v187 = vld [vmem:[%s174 + $0x60] sm:$0xff]
    %v188 = vld [vmem:[%s174 + $0x68] sm:$0xff]
    %v189 = vld [vmem:[%s174 + $0x70] sm:$0xff]
    %v190 = vld [vmem:[%s174 + $0x78] sm:$0xff]
    %v191 = vld [vmem:[%s174 + $0x80] sm:$0xff]
    %v192 = vld [vmem:[%s174 + $0x88] sm:$0xff]
    %v193 = vld [vmem:[%s174 + $0x90] sm:$0xff]
    %v194 = vld [vmem:[%s174 + $0x98] sm:$0xff]
    %v195 = vld [vmem:[%s174 + $0xa0] sm:$0xff]
    %v196 = vld [vmem:[%s174 + $0xa8] sm:$0xff]
    %v197 = vld [vmem:[%s174 + $0xb0] sm:$0xff]
    %v198 = vld [vmem:[%s174 + $0xb8] sm:$0xff]
    %v199 = vld [vmem:[%s174 + $0xc0] sm:$0xff]
    %v200 = vld [vmem:[%s174 + $0xc8] sm:$0xff]
    %v201 = vld [vmem:[%s174 + $0xd0] sm:$0xff]
    %v202 = vld [vmem:[%s174 + $0xd8] sm:$0xff]
    %v203 = vld [vmem:[%s174 + $0xe0] sm:$0xff]
    %v204 = vld [vmem:[%s174 + $0xe8] sm:$0xff]
    %v205 = vld [vmem:[%s174 + $0xf0] sm:$0xff]
    %v206 = vld [vmem:[%s174 + $0xf8] sm:$0xff]
    %v207 = vld [vmem:[%s174 + $0x100] sm:$0xff]
    %v208 = vld [vmem:[%s174 + $0x108] sm:$0xff]
    %v209 = vld [vmem:[%s174 + $0x110] sm:$0xff]
    %v210 = vld [vmem:[%s174 + $0x118] sm:$0xff]
    %v211 = vld [vmem:[%s174 + $0x120] sm:$0xff]
    %v212 = vld [vmem:[%s174 + $0x128] sm:$0xff]
    %v213 = vld [vmem:[%s174 + $0x130] sm:$0xff]
    %v214 = vld [vmem:[%s174 + $0x138] sm:$0xff]
    %v215 = vld [vmem:[%s174 + $0x140] sm:$0xff]
    %v216 = vld [vmem:[%s174 + $0x148] sm:$0xff]
    %v217 = vld [vmem:[%s174 + $0x150] sm:$0xff]
    %v218 = vld [vmem:[%s174 + $0x158] sm:$0xff]
    %v219 = vld [vmem:[%s174 + $0x160] sm:$0xff]
    %v220 = vld [vmem:[%s174 + $0x168] sm:$0xff]
    %v221 = vld [vmem:[%s174 + $0x170] sm:$0xff]
    %v222 = vld [vmem:[%s174 + $0x178] sm:$0xff]
    %v223 = vld [vmem:[%s174 + $0x180] sm:$0xff]
    %v224 = vld [vmem:[%s174 + $0x188] sm:$0xff]
    %v225 = vld [vmem:[%s174 + $0x190] sm:$0xff]
    %v226 = vld [vmem:[%s174 + $0x198] sm:$0xff]
    %v227 = vld [vmem:[%s174 + $0x1a0] sm:$0xff]
    %v228 = vld [vmem:[%s174 + $0x1a8] sm:$0xff]
    %v229 = vld [vmem:[%s174 + $0x1b0] sm:$0xff]
    %v230 = vld [vmem:[%s174 + $0x1b8] sm:$0xff]
    %v231 = vld [vmem:[%s174 + $0x1c0] sm:$0xff]
    %v232 = vld [vmem:[%s174 + $0x1c8] sm:$0xff]
    %v233 = vld [vmem:[%s174 + $0x1d0] sm:$0xff]
    %v234 = vld [vmem:[%s174 + $0x1d8] sm:$0xff]
    %v235 = vld [vmem:[%s174 + $0x1e0] sm:$0xff]
    %v236 = vld [vmem:[%s174 + $0x1e8] sm:$0xff]
    %v237 = vld [vmem:[%s174 + $0x1f0] sm:$0xff]
    %v238 = vld [vmem:[%s174 + $0x1f8] sm:$0xff]
    %vm243 = vcmask 1041409
    %v244 = vsel %vm243, %v102, %v88
    %v245 = vsel %vm243, %v109, %v95
    %248 = vmatprep.subr.mxu0 %v176
    %249 = vmatpush1.msra.mxu0 %v175
    %250 = vmatprep.subr.mxu0 %v178
    %251 = vmatpush1.msra.mxu0 %v177
    %252 = vmatprep.subr.mxu0 %v180
    %253 = vmatpush1.msra.mxu0 %v179
    %254 = vmatprep.subr.mxu0 %v182
    %255 = vmatpush1.msra.mxu0 %v181
    %256 = vmatprep.subr.mxu0 %v184
    %257 = vmatpush1.msra.mxu0 %v183
    %258 = vmatprep.subr.mxu0 %v186
    %259 = vmatpush1.msra.mxu0 %v185
    %260 = vmatprep.subr.mxu0 %v188
    %261 = vmatpush1.msra.mxu0 %v187
    %262 = vmatprep.subr.mxu0 %v190
    %263 = vmatpush1.msra.mxu0 %v189
    %264 = vmatprep.subr.mxu0 %v192
    %265 = vmatpush1.msra.mxu0 %v191
    %266 = vmatprep.subr.mxu0 %v194
    %267 = vmatpush1.msra.mxu0 %v193
    %268 = vmatprep.subr.mxu0 %v196
    %269 = vmatpush1.msra.mxu0 %v195
    %270 = vmatprep.subr.mxu0 %v198
    %271 = vmatpush1.msra.mxu0 %v197
    %272 = vmatprep.subr.mxu0 %v200
    %273 = vmatpush1.msra.mxu0 %v199
    %274 = vmatprep.subr.mxu0 %v202
    %275 = vmatpush1.msra.mxu0 %v201
    %276 = vmatprep.subr.mxu0 %v204
    %277 = vmatpush1.msra.mxu0 %v203
    %278 = vmatprep.subr.mxu0 %v206
    %279 = vmatpush1.msra.mxu0 %v205
    %280 = vmatprep.subr.mxu0 %v208
    %281 = vmatpush1.msra.mxu0 %v207
    %282 = vmatprep.subr.mxu0 %v210
    %283 = vmatpush1.msra.mxu0 %v209
    %284 = vmatprep.subr.mxu0 %v212
    %285 = vmatpush1.msra.mxu0 %v211
    %286 = vmatprep.subr.mxu0 %v214
    %287 = vmatpush1.msra.mxu0 %v213
    %288 = vmatprep.subr.mxu0 %v216
    %289 = vmatpush1.msra.mxu0 %v215
    %290 = vmatprep.subr.mxu0 %v218
    %291 = vmatpush1.msra.mxu0 %v217
    %292 = vmatprep.subr.mxu0 %v220
    %293 = vmatpush1.msra.mxu0 %v219
    %294 = vmatprep.subr.mxu0 %v222
    %295 = vmatpush1.msra.mxu0 %v221
    %296 = vmatprep.subr.mxu0 %v224
    %297 = vmatpush1.msra.mxu0 %v223
    %298 = vmatprep.subr.mxu0 %v226
    %299 = vmatpush1.msra.mxu0 %v225
    %300 = vmatprep.subr.mxu0 %v228
    %301 = vmatpush1.msra.mxu0 %v227
    %302 = vmatprep.subr.mxu0 %v230
    %303 = vmatpush1.msra.mxu0 %v229
    %304 = vmatprep.subr.mxu0 %v232
    %305 = vmatpush1.msra.mxu0 %v231
    %306 = vmatprep.subr.mxu0 %v234
    %307 = vmatpush1.msra.mxu0 %v233
    %308 = vmatprep.subr.mxu0 %v236
    %309 = vmatpush1.msra.mxu0 %v235
    %310 = vmatprep.subr.mxu0 %v238
    %311 = vmatpush1.msra.mxu0 %v237
    %312 = vmatprep.mubr.f32.mxu0 %v245
    %313 = vmatmul.mubr.f32.gmra.mrb[0].mxu0 %v244
    %v314 = vpop.f32.mrb[0].mxu0
    %v315 = vadd.f32 0.0, %v314
    %v316 = vpop.f32.mrb[0].mxu0
    %v317 = vadd.f32 0.0, %v316
    %318 = vdwg.mxu0
    %v323 = vsel %vm243, %v80, %v78
    %v324 = vsel %vm243, %v81, %v79
    %327 = vmatprep.subr.mxu0 %v111
    %328 = vmatpush1.msra.mxu0 %v110
    %329 = vmatprep.subr.mxu0 %v113
    %330 = vmatpush1.msra.mxu0 %v112
    %331 = vmatprep.subr.mxu0 %v115
    %332 = vmatpush1.msra.mxu0 %v114
    %333 = vmatprep.subr.mxu0 %v117
    %334 = vmatpush1.msra.mxu0 %v116
    %335 = vmatprep.subr.mxu0 %v119
    %336 = vmatpush1.msra.mxu0 %v118
    %337 = vmatprep.subr.mxu0 %v121
    %338 = vmatpush1.msra.mxu0 %v120
    %339 = vmatprep.subr.mxu0 %v123
    %340 = vmatpush1.msra.mxu0 %v122
    %341 = vmatprep.subr.mxu0 %v125
    %342 = vmatpush1.msra.mxu0 %v124
    %343 = vmatprep.subr.mxu0 %v127
    %344 = vmatpush1.msra.mxu0 %v126
    %345 = vmatprep.subr.mxu0 %v129
    %346 = vmatpush1.msra.mxu0 %v128
    %347 = vmatprep.subr.mxu0 %v131
    %348 = vmatpush1.msra.mxu0 %v130
    %349 = vmatprep.subr.mxu0 %v133
    %350 = vmatpush1.msra.mxu0 %v132
    %351 = vmatprep.subr.mxu0 %v135
    %352 = vmatpush1.msra.mxu0 %v134
    %353 = vmatprep.subr.mxu0 %v137
    %354 = vmatpush1.msra.mxu0 %v136
    %355 = vmatprep.subr.mxu0 %v139
    %356 = vmatpush1.msra.mxu0 %v138
    %357 = vmatprep.subr.mxu0 %v141
    %358 = vmatpush1.msra.mxu0 %v140
    %359 = vmatprep.subr.mxu0 %v143
    %360 = vmatpush1.msra.mxu0 %v142
    %361 = vmatprep.subr.mxu0 %v145
    %362 = vmatpush1.msra.mxu0 %v144
    %363 = vmatprep.subr.mxu0 %v147
    %364 = vmatpush1.msra.mxu0 %v146
    %365 = vmatprep.subr.mxu0 %v149
    %366 = vmatpush1.msra.mxu0 %v148
    %367 = vmatprep.subr.mxu0 %v151
    %368 = vmatpush1.msra.mxu0 %v150
    %369 = vmatprep.subr.mxu0 %v153
    %370 = vmatpush1.msra.mxu0 %v152
    %371 = vmatprep.subr.mxu0 %v155
    %372 = vmatpush1.msra.mxu0 %v154
    %373 = vmatprep.subr.mxu0 %v157
    %374 = vmatpush1.msra.mxu0 %v156
    %375 = vmatprep.subr.mxu0 %v159
    %376 = vmatpush1.msra.mxu0 %v158
    %377 = vmatprep.subr.mxu0 %v161
    %378 = vmatpush1.msra.mxu0 %v160
    %379 = vmatprep.subr.mxu0 %v163
    %380 = vmatpush1.msra.mxu0 %v162
    %381 = vmatprep.subr.mxu0 %v165
    %382 = vmatpush1.msra.mxu0 %v164
    %383 = vmatprep.subr.mxu0 %v167
    %384 = vmatpush1.msra.mxu0 %v166
    %385 = vmatprep.subr.mxu0 %v169
    %386 = vmatpush1.msra.mxu0 %v168
    %387 = vmatprep.subr.mxu0 %v171
    %388 = vmatpush1.msra.mxu0 %v170
    %389 = vmatprep.subr.mxu0 %v173
    %390 = vmatpush1.msra.mxu0 %v172
    %391 = vmatprep.mubr.f32.mxu0 %v324
    %392 = vmatmul.mubr.f32.gmra.mrb[0].mxu0 %v323
    %v393 = vpop.f32.mrb[0].mxu0
    %v394 = vadd.f32 %v315, %v393
    %v395 = vpop.f32.mrb[0].mxu0
    %v396 = vadd.f32 %v317, %v395
    %397 = vdwg.mxu0
    %v398 = vmul.f32 %v394, 0.5
    %v399 = vmul.f32 %v396, 0.5
    %v400 = vtanh.pop %v398
    %v401 = vtanh.pop %v399
    %v402 = vadd.f32 %v400, 1.0
    %v403 = vadd.f32 %v401, 1.0
    %v404 = vmul.f32 %v402, 0.5
    %v405 = vmul.f32 %v403, 0.5
    %v408 = vcombine.low %v404, %v405
    %v410 = vunpack.c.l.s4 1966171168
    %v411 = vunpack.c.0.s8 %v410
    %v412 = vlaneseq
    %v413 = vshrl.u32 %v412, 7
    %v414 = vsub.s32 %v411, %v413
    %v415 = vrot.slane %v408, %v414
    %v416 = vcombine.high %v415, %v415
    %v418 = vunpack.c.l.s4 1966171168
    %v419 = vunpack.c.0.s8 %v418
    %v420 = vlaneseq
    %v421 = vshrl.u32 %v420, 7
    %v422 = vsub.s32 %v419, %v421
    %v423 = vrot.slane %v415, %v422
    %v425 = vunpack.c.l.s4 1966171168
    %v426 = vunpack.c.0.s8 %v425
    %v427 = vlaneseq
    %v428 = vshrl.u32 %v427, 7
    %v429 = vsub.s32 %v426, %v428
    %v430 = vrot.slane %v416, %v429
    %v431 = vlaneseq
    %v432 = vshrl.u32 %v431, 7
    %v433 = vsub.s32 0, %v432
    %v434 = vrot.slane %v423, %v433
    %v435 = vlaneseq
    %v436 = vshrl.u32 %v435, 7
    %v437 = vsub.s32 1, %v436
    %v438 = vrot.slane %v423, %v437
    %v439 = vlaneseq
    %v440 = vshrl.u32 %v439, 7
    %v441 = vsub.s32 0, %v440
    %v442 = vrot.slane %v430, %v441
    %v443 = vlaneseq
    %v444 = vshrl.u32 %v443, 7
    %v445 = vsub.s32 1, %v444
    %v446 = vrot.slane %v430, %v445
    %v451 = vmul.f32 %v434, %v40
    %v452 = vmul.f32 %v438, %v44
    %v453 = vmul.f32 %v442, %v41
    %v454 = vmul.f32 %v446, %v45
    %v459 = vcombine.low %v451, %v452
    %v460 = vcombine.low %v453, %v454
    %463 = vst [vmem:[#allocation7] sm:$0xff] %v459
    %464 = vst [vmem:[#allocation7 + $0x8] sm:$0xff] %v460
    // Predicated region
    $region18: #{tpu_custom_call.1} parent=1 // pred_check
      _
    $region19: #{tpu_custom_call.1} parent=1 // pred_check_branch
      %466 = sbr.rel (0) target = $region21
    $region20: #{tpu_custom_call.1} parent=1 // pred_region
      %s468 = ssub.s32 256, 256
      %469 = vsyncadd [#allocation4], %s468
      %s470 = sshll.u32 [#allocation7], 4
      %s471 = int_to_ptr.vmem [resolvable:$true] %s470
      %476 = dma.vmem_to_hbm [thread:$0]  %s471, 256, %s2, [#allocation4], 128, 128, 8
    $region21: #{tpu_custom_call.1} parent=1 // pred_fallthru
      _
    // Predicated region
    $region22: #{tpu_custom_call.1} parent=1 // pred_check
      _
    $region23: #{tpu_custom_call.1} parent=1 // pred_check_branch
      %478 = sbr.rel (0) target = $region25
    $region24: #{tpu_custom_call.1} parent=1 // pred_region
      %479 = dma.done [#allocation4], 256
    $region25: #{tpu_custom_call.1} parent=1 // pred_fallthru
      _
    %480 = vsyncpa [#allocation3], 1
    %481 = vsyncpa [#allocation6], 1
    %482 = vsyncpa [#allocation4], 1

</llo_original>
